<compile_context>
chip_gen: v7x
topology: tpu7x:2x2x1
jax: 0.10.0
libtpu: 0.0.40
codegen_flags: <defaults>
</compile_context>

<pallas_src>
import jax
import jax.numpy as jnp
from jax.experimental import pallas as pl
from jax.experimental.pallas import tpu as pltpu


def _lateral_conn_kernel(p_ref, pose_ref, w_ref, o_ref):
    # p_ref    : (K_pad, rows)   im2col patches for this (n, t-tile); rows = T_tile*H_out*W_out (lane-dense)
    # pose_ref : (C_out, rows)   pose residual (lane-dense)
    # w_ref    : (C_out, K_pad)  folded conv weight
    # o_ref    : (C_out, rows)
    acc = jnp.dot(w_ref[...], p_ref[...], preferred_element_type=jnp.float32)
    o_ref[...] = (acc + pose_ref[...].astype(jnp.float32)).astype(o_ref.dtype)


def _pick_t_tile(t_out, hw):
    # largest divisor of T_out whose row-block is lane aligned (or the full axis),
    # capped so the per-step patch tile stays small.
    cands = [d for d in range(1, t_out + 1)
             if t_out % d == 0 and ((d * hw) % 128 == 0 or d == t_out)]
    good = [d for d in cands if d * hw <= 4096]
    return max(good) if good else min(cands)


def lateral_conn_forward(x_rgb, x_pose, weight, compute_dtype=None):
    """Returns (None, conv3d(x_rgb) + x_pose) exactly like Lateral_Conn.forward."""
    N, C_in, T, H, W = x_rgb.shape
    C_out, _, KT, KH, KW = weight.shape
    pt, ph, pw = KT // 2, KH // 2, KW // 2
    st, sh, sw = 1, 2, 2
    T_out = (T + 2 * pt - KT) // st + 1
    H_out = (H + 2 * ph - KH) // sh + 1
    W_out = (W + 2 * pw - KW) // sw + 1
    HW = H_out * W_out
    R_total = T_out * HW

    if compute_dtype is None:
        compute_dtype = x_rgb.dtype

    # ---- glue (plain JAX): zero-pad + im2col; fold all taps into the contraction dim ----
    x_pad = jnp.pad(x_rgb, ((0, 0), (0, 0), (pt, pt), (ph, ph), (pw, pw)))
    taps = []
    for kt in range(KT):
        for kh in range(KH):
            for kw in range(KW):
                taps.append(x_pad[:, :,
                                  kt:kt + T_out * st:st,
                                  kh:kh + H_out * sh:sh,
                                  kw:kw + W_out * sw:sw])
    # (N, ntaps, C_in, T_out, H_out, W_out) -> (N, K, T_out*H_out*W_out), K index = tap*C_in + c
    K = KT * KH * KW * C_in
    patches = jnp.stack(taps, axis=1).reshape(N, K, R_total).astype(compute_dtype)

    # matching weight fold: (C_out, C_in, KT, KH, KW) -> (C_out, K) with the same tap*C_in + c order
    w_mat = jnp.transpose(weight, (0, 2, 3, 4, 1)).reshape(C_out, K).astype(compute_dtype)

    # pad K to a multiple of 128 (lane dim of the weight tile / sublane dim of the patch tile)
    K_pad = ((K + 127) // 128) * 128
    if K_pad != K:
        patches = jnp.pad(patches, ((0, 0), (0, K_pad - K), (0, 0)))
        w_mat = jnp.pad(w_mat, ((0, 0), (0, K_pad - K)))

    pose = x_pose.reshape(N, C_out, R_total)

    T_tile = _pick_t_tile(T_out, HW)
    rows = T_tile * HW
    grid = (N, T_out // T_tile)

    out = pl.pallas_call(
        _lateral_conn_kernel,
        out_shape=jax.ShapeDtypeStruct((N, C_out, R_total), x_pose.dtype),
        grid=grid,
        in_specs=[
            # im2col patches for this (n, t-tile)
            pl.BlockSpec((None, K_pad, rows), lambda n, t: (n, 0, t)),
            # pose residual for this (n, t-tile)
            pl.BlockSpec((None, C_out, rows), lambda n, t: (n, 0, t)),
            # full folded weight (tiny, constant block index)
            pl.BlockSpec((C_out, K_pad), lambda n, t: (0, 0)),
        ],
        out_specs=pl.BlockSpec((None, C_out, rows), lambda n, t: (n, 0, t)),
        compiler_params=pltpu.CompilerParams(
            dimension_semantics=("parallel", "parallel"),
            vmem_limit_bytes=48 * 1024 * 1024),
    )(patches, pose, w_mat)

    fused = out.reshape(N, C_out, T_out, H_out, W_out)   # already NCDHW
    return None, fused
    # TODO(synk): variant='spat_att' (CBAM), interpolate / adapt_first / pose2rgb branches
    # of Lateral_Conn are not exercised by the default config and are not implemented.


if __name__ == "__main__":
    key = jax.random.PRNGKey(0)
    k1, k2, k3 = jax.random.split(key, 3)

    N, C_in, C_out = 2, 4, 8
    T, H, W = 8, 16, 16
    KT, KH, KW = 7, 3, 3
    T_out, H_out, W_out = T, H // 2, W // 2

    x_rgb = jax.random.normal(k1, (N, C_in, T, H, W), jnp.float32)
    x_pose = jax.random.normal(k2, (N, C_out, T_out, H_out, W_out), jnp.float32)
    # kaiming_normal_ (fan_in mode, gain=sqrt(2)) on Conv3d weight (C_out, C_in, kT, kH, kW)
    fan_in = C_in * KT * KH * KW
    weight = jax.random.normal(k3, (C_out, C_in, KT, KH, KW), jnp.float32) * jnp.sqrt(2.0 / fan_in)

    spat_att, fused = lateral_conn_forward(x_rgb, x_pose, weight)
    fused = jax.block_until_ready(fused)

    # pure-JAX reference of the same forward pass
    conv_ref = jax.lax.conv_general_dilated(
        x_rgb, weight,
        window_strides=(1, 2, 2),
        padding=((3, 3), (1, 1), (1, 1)),
        dimension_numbers=("NCDHW", "OIDHW", "NCDHW"),
        precision=jax.lax.Precision.HIGHEST)
    ref = conv_ref + x_pose

    assert spat_att is None
    assert fused.shape == ref.shape, (fused.shape, ref.shape)
    err = float(jnp.max(jnp.abs(fused - ref)))
    assert err < 5e-2, f"max abs err too large: {err}"
    print("KERNEL_OK")
</pallas_src>

<mosaic_0001>
module attributes {stable_mosaic.version = 11 : i64} {
  func.func @_lateral_conn_kernel(%arg0: i32, %arg1: i32, %arg2: memref<1x256x512xf32, #tpu.memory_space<vmem>>, %arg3: memref<1x8x512xf32, #tpu.memory_space<vmem>>, %arg4: memref<8x256xf32, #tpu.memory_space<vmem>>, %arg5: memref<1x8x512xf32, #tpu.memory_space<vmem>>) attributes {dimension_semantics = [#tpu.dimension_semantics<parallel>, #tpu.dimension_semantics<parallel>], iteration_bounds = array<i64: 2, 1>, scalar_prefetch = 0 : i64, scratch_operands = 0 : i64, tpu.core_type = #tpu.core_type<tc>, window_params = [{transform_indices = @transform_0, window_bounds = array<i64: 1, 256, 512>}, {transform_indices = @transform_1, window_bounds = array<i64: 1, 8, 512>}, {pipeline_mode = #tpu.pipeline_mode<synchronous>, transform_indices = @transform_2, window_bounds = array<i64: 8, 256>}, {transform_indices = @transform_3, window_bounds = array<i64: 1, 8, 512>}]} {
    %c0 = arith.constant 0 : index
    %c0_0 = arith.constant 0 : index
    %0 = vector.load %arg4[%c0, %c0_0] : memref<8x256xf32, #tpu.memory_space<vmem>>, vector<8x256xf32>
    %c0_1 = arith.constant 0 : index
    %c0_2 = arith.constant 0 : index
    %c0_3 = arith.constant 0 : index
    %1 = vector.load %arg2[%c0_1, %c0_2, %c0_3] : memref<1x256x512xf32, #tpu.memory_space<vmem>>, vector<1x256x512xf32>
    %2 = vector.shape_cast %1 : vector<1x256x512xf32> to vector<256x512xf32>
    %cst = arith.constant dense<0.000000e+00> : vector<8x512xf32>
    %3 = tpu.matmul %0, %2, %cst {dimension_numbers = #tpu.dot_dimension_numbers<[1], [0], [0], [1], [0, 0, 1, 1], [], []>} : vector<8x256xf32>, vector<256x512xf32>, vector<8x512xf32> -> vector<8x512xf32>
    %c0_4 = arith.constant 0 : index
    %c0_5 = arith.constant 0 : index
    %c0_6 = arith.constant 0 : index
    %4 = vector.load %arg3[%c0_4, %c0_5, %c0_6] : memref<1x8x512xf32, #tpu.memory_space<vmem>>, vector<1x8x512xf32>
    %5 = vector.shape_cast %4 : vector<1x8x512xf32> to vector<8x512xf32>
    %6 = arith.addf %3, %5 : vector<8x512xf32>
    %c0_7 = arith.constant 0 : index
    %c0_8 = arith.constant 0 : index
    %c0_9 = arith.constant 0 : index
    %7 = vector.load %arg5[%c0_7, %c0_8, %c0_9] : memref<1x8x512xf32, #tpu.memory_space<vmem>>, vector<1x8x512xf32>
    %8 = vector.shape_cast %7 : vector<1x8x512xf32> to vector<8x512xf32>
    %9 = vector.shape_cast %6 : vector<8x512xf32> to vector<1x8x512xf32>
    tpu.vector_store %arg5[%c0_7, %c0_8, %c0_9], %9 {strides = array<i32>} : memref<1x8x512xf32, #tpu.memory_space<vmem>>, vector<1x8x512xf32>,
    return
  }
  func.func @transform_0(%arg0: i32, %arg1: i32) -> (i32, i32, i32) {
    %c0_i32 = arith.constant 0 : i32
    %c0_i32_0 = arith.constant 0 : i32
    return %arg0, %c0_i32, %arg1 : i32, i32, i32
  }
  func.func @transform_1(%arg0: i32, %arg1: i32) -> (i32, i32, i32) {
    %c0_i32 = arith.constant 0 : i32
    %c0_i32_0 = arith.constant 0 : i32
    return %arg0, %c0_i32, %arg1 : i32, i32, i32
  }
  func.func @transform_2(%arg0: i32, %arg1: i32) -> (i32, i32) {
    %c0_i32 = arith.constant 0 : i32
    %c0_i32_0 = arith.constant 0 : i32
    %c0_i32_1 = arith.constant 0 : i32
    return %c0_i32, %c0_i32_0 : i32, i32
  }
  func.func @transform_3(%arg0: i32, %arg1: i32) -> (i32, i32, i32) {
    %c0_i32 = arith.constant 0 : i32
    %c0_i32_0 = arith.constant 0 : i32
    return %arg0, %c0_i32, %arg1 : i32, i32, i32
  }
}

</mosaic_0001>

<llo_original>
// kernel: tpu_custom_call.1
$region0: #{tpu_custom_call.1}
  #allocation0 [shape = 'u32[]', space=smem, size = 0x4, offset = 0x4, fixed_abs, tag = 'smem constant byte address 0x4 - core index']
  #allocation1 [shape = 'u32[144,128]{1,0:T(1,128)}', space=vmem, size = 0x12000, scoped, tag = 'internal scratch']
  %s0 = inlined_call_operand.hbm [shape: f32[2,256,512], index: 0, kind: input, shape index: {}]
  %s1 = inlined_call_operand.hbm [shape: f32[2,8,512], index: 1, kind: input, shape index: {}]
  %s2 = inlined_call_operand.hbm [shape: f32[8,256], index: 2, kind: input, shape index: {}]
  %s3 = inlined_call_operand.hbm [shape: f32[2,8,512], index: 3, kind: output, shape index: {}]
  %s4 = sld [smem:[#allocation0]]
  $region57: #{tpu_custom_call.1} parent=0
    _
  %s6 = ssub.s32 1, %s4
  %s7 = scalar_select 0, %s6, %s4
  $region1: #{tpu_custom_call.1} parent=0
    #allocation2 [shape = 'u8[1048576]{0}', space=vmem, size = 0x100000, scoped, tag = 'input window, operand 0']
    #allocation3 [shape = 's32[2]{0}', space=sflag, size = 0x8, scoped, tag = 'scoped memory for tpu_custom_call.1']
    #allocation4 [shape = 's32[2]{0}', space=sflag, size = 0x8, scoped, tag = 'scoped memory for tpu_custom_call.1']
    #allocation5 [shape = 'u8[32768]{0}', space=vmem, size = 0x8000, scoped, tag = 'input window, operand 1']
    #allocation6 [shape = 's32[2]{0}', space=sflag, size = 0x8, scoped, tag = 'scoped memory for tpu_custom_call.1']
    #allocation7 [shape = 'u8[8192]{0}', space=vmem, size = 0x2000, scoped, tag = 'input window, operand 2, single buffered']
    #allocation8 [shape = 'u8[32768]{0}', space=vmem, size = 0x8000, scoped, tag = 'output window, operand 0']
    %8 = vsyncpa [#allocation3], 0
    %s9 = scalar_lea.sflag [#allocation3], 1
    %10 = vsyncpa %s9, 0
    %11 = vsyncpa [#allocation6], 0
    %s12 = scalar_lea.sflag [#allocation6], 1
    %13 = vsyncpa %s12, 0
    %14 = vsyncpa [#allocation4], 0
    %s15 = scalar_lea.sflag [#allocation4], 1
    %16 = vsyncpa %s15, 0
    loop: start=0, step=1, limit=4
    $region2: #{tpu_custom_call.1} parent=1 // loop_pre_header
      _
    $region3: #{tpu_custom_call.1} parent=1 // loop_header
      %s18 = sphi 0, %s22
      %p19 = scmp.ge.s32.totalorder %s18, 4
      %s25 = sphi 0, %s37
      %s26 = sphi 0, %s33
      %s27 = sphi 0, %s25
      %s28 = sphi 0, %s26
      %s29 = sphi 0, %s27
      %s30 = sphi 0, %s28
      %s42 = sphi 0, %s44
      %s45 = sphi 0, %s42
      %s46 = sphi 0, %s45
      %s62 = sphi 0, %s46
      %s70 = sphi 0, %s72
      %s73 = sphi 0, %s70
      %s74 = sphi 0, %s73
      %s90 = sphi 0, %s74
      %s94 = sphi 0, %s94
      %s96 = sphi 0, %s94
      %s97 = sphi 0, %s96
      %s111 = sphi 0, %s97
      %s119 = sphi 0, %s121
      %s122 = sphi 0, %s119
      %s123 = sphi 0, %s122
      %s139 = sphi 0, %s123
    $region4: #{tpu_custom_call.1} parent=1 // loop_header_branch
      %21 = sbr.rel (%p19) target = $region8
    $region5: #{tpu_custom_call.1} parent=1 // loop_body
      %s23 = ssub.s32 %s18, 1
      %s24 = ssub.s32 %s18, 2
      %s31 = sadd.s32 1, %s26
      %p32 = scmp.ge.s32.totalorder %s31, 1
      %s33 = scalar_select %p32, 0, %s31
      %s34 = sadd.s32 1, %s25
      %s35 = scalar_select %p32, %s34, %s25
      %p36 = scmp.ge.s32.totalorder %s35, 2
      %s37 = scalar_select %p36, 0, %s35
      %s38 = ssub.s32 %s25, %s37
      %s39 = ssub.s32 %s26, %s33
      %s40 = sor.u32 %s38, %s39
      %p41 = scmp.eq.s32.totalorder %s40, 0
      %s43 = sadd.s32 %s42, 1
      %s44 = scalar_select %p41, %s42, %s43
      %p47 = pneg %p41
      %p48 = scmp.eq.s32.totalorder %s18, 1
      %p49 = por %p47, %p48
      %p50 = scmp.ne.s32.totalorder %s42, %s45
      %p51 = scmp.eq.s32.totalorder %s18, 0
      %p52 = por %p50, %p51
      %p53 = scmp.ne.s32.totalorder %s42, %s45
      %p54 = scmp.eq.s32.totalorder %s23, 1
      %p55 = por %p53, %p54
      %p56 = scmp.ne.s32.totalorder %s45, %s46
      %p57 = scmp.eq.s32.totalorder %s23, 0
      %p58 = por %p56, %p57
      %p59 = scmp.ne.s32.totalorder %s45, %s46
      %p60 = scmp.eq.s32.totalorder %s24, 1
      %p61 = por %p59, %p60
      %p63 = scmp.ne.s32.totalorder %s46, %s62
      %p64 = scmp.eq.s32.totalorder %s24, 0
      %p65 = por %p63, %p64
      %s66 = ssub.s32 %s25, %s37
      %s67 = ssub.s32 %s26, %s33
      %s68 = sor.u32 %s66, %s67
      %p69 = scmp.eq.s32.totalorder %s68, 0
      %s71 = sadd.s32 %s70, 1
      %s72 = scalar_select %p69, %s70, %s71
      %p75 = pneg %p69
      %p76 = scmp.eq.s32.totalorder %s18, 1
      %p77 = por %p75, %p76
      %p78 = scmp.ne.s32.totalorder %s70, %s73
      %p79 = scmp.eq.s32.totalorder %s18, 0
      %p80 = por %p78, %p79
      %p81 = scmp.ne.s32.totalorder %s70, %s73
      %p82 = scmp.eq.s32.totalorder %s23, 1
      %p83 = por %p81, %p82
      %p84 = scmp.ne.s32.totalorder %s73, %s74
      %p85 = scmp.eq.s32.totalorder %s23, 0
      %p86 = por %p84, %p85
      %p87 = scmp.ne.s32.totalorder %s73, %s74
      %p88 = scmp.eq.s32.totalorder %s24, 1
      %p89 = por %p87, %p88
      %p91 = scmp.ne.s32.totalorder %s74, %s90
      %p92 = scmp.eq.s32.totalorder %s24, 0
      %p93 = por %p91, %p92
      %s95 = sadd.s32 %s94, 1
      %p98 = scmp.eq.s32.totalorder %s18, 1
      %p99 = scmp.ne.s32.totalorder %s94, %s96
      %p100 = scmp.eq.s32.totalorder %s18, 0
      %p101 = por %p99, %p100
      %p102 = scmp.ne.s32.totalorder %s94, %s96
      %p103 = scmp.eq.s32.totalorder %s23, 1
      %p104 = por %p102, %p103
      %p105 = scmp.ne.s32.totalorder %s96, %s97
      %p106 = scmp.eq.s32.totalorder %s23, 0
      %p107 = por %p105, %p106
      %p108 = scmp.ne.s32.totalorder %s96, %s97
      %p109 = scmp.eq.s32.totalorder %s24, 1
      %p110 = por %p108, %p109
      %p112 = scmp.ne.s32.totalorder %s97, %s111
      %p113 = scmp.eq.s32.totalorder %s24, 0
      %p114 = por %p112, %p113
      %s115 = ssub.s32 %s25, %s37
      %s116 = ssub.s32 %s26, %s33
      %s117 = sor.u32 %s115, %s116
      %p118 = scmp.eq.s32.totalorder %s117, 0
      %s120 = sadd.s32 %s119, 1
      %s121 = scalar_select %p118, %s119, %s120
      %p124 = pneg %p118
      %p125 = scmp.eq.s32.totalorder %s18, 1
      %p126 = por %p124, %p125
      %p127 = scmp.ne.s32.totalorder %s119, %s122
      %p128 = scmp.eq.s32.totalorder %s18, 0
      %p129 = por %p127, %p128
      %p130 = scmp.ne.s32.totalorder %s119, %s122
      %p131 = scmp.eq.s32.totalorder %s23, 1
      %p132 = por %p130, %p131
      %p133 = scmp.ne.s32.totalorder %s122, %s123
      %p134 = scmp.eq.s32.totalorder %s23, 0
      %p135 = por %p133, %p134
      %p136 = scmp.ne.s32.totalorder %s122, %s123
      %p137 = scmp.eq.s32.totalorder %s24, 1
      %p138 = por %p136, %p137
      %p140 = scmp.ne.s32.totalorder %s123, %s139
      %p141 = scmp.eq.s32.totalorder %s24, 0
      %p142 = por %p140, %p141
      %p143 = scmp.le.s32.totalorder 1, %s18
      %p144 = scmp.lt.s32.totalorder %s18, 3
      %p145 = pnand %p143, %p144
      %p146 = pneg %p145
      // Predicated region
      $region9: #{tpu_custom_call.1} parent=5 // pred_check
        _
      $region10: #{tpu_custom_call.1} parent=5 // pred_check_branch
        %148 = sbr.rel (%p145) target = $region12
      $region11: #{tpu_custom_call.1} parent=5 // pred_region
        %s149 = ssub.s32 %s18, 1
        // Predicated region
        $region13: #{tpu_custom_call.1} parent=11 // pred_check
          %p150 = pneg %p107
        $region14: #{tpu_custom_call.1} parent=11 // pred_check_branch
          %152 = sbr.rel (%p150) target = $region16
        $region15: #{tpu_custom_call.1} parent=11 // pred_region
          %s154 = ssub.s32 256, 256
          %155 = vsyncadd [#allocation6], %s154
          %s157 = sshll.u32 [#allocation7], 4
          %s158 = int_to_ptr.vmem [resolvable:$true] %s157
          %160 = dma.hbm_to_vmem [thread:$0]  %s2, 256, %s158, [#allocation6]
        $region16: #{tpu_custom_call.1} parent=11 // pred_fallthru
          _
      $region12: #{tpu_custom_call.1} parent=5 // pred_fallthru
        _
      %p161 = scmp.lt.s32.totalorder %s18, 2
      // Predicated region
      $region17: #{tpu_custom_call.1} parent=5 // pred_check
        %p162 = pneg %p161
      $region18: #{tpu_custom_call.1} parent=5 // pred_check_branch
        %164 = sbr.rel (%p162) target = $region20
      $region19: #{tpu_custom_call.1} parent=5 // pred_region
        // Predicated region
        $region21: #{tpu_custom_call.1} parent=19 // pred_check
          %p165 = pneg %p52
        $region22: #{tpu_custom_call.1} parent=19 // pred_check_branch
          %167 = sbr.rel (%p165) target = $region24
        $region23: #{tpu_custom_call.1} parent=19 // pred_region
          %s168 = sand.u32 %s42, 1
          %s169 = scalar_lea.sflag [#allocation3], %s168
          %s170 = sand.u32 %s42, 1
          %s171 = smul.addr %s170, 1024
          %s172 = scalar_lea.vmem [#allocation2], %s171
          %s173 = smul.u32 4, %s26
          %s175 = ssub.s32 16384, 16384
          %176 = vsyncadd %s169, %s175
          %s177 = smul.addr %s25, 128
          %s178 = sadd.s32 %s173, %s177
          %s179 = smul.addr %s178, 128
          %s180 = scalar_lea.hbm %s0, %s179
          %s181 = sshll.u32 %s172, 4
          %s182 = int_to_ptr.vmem [resolvable:$true] %s181
          %187 = dma.hbm_to_vmem [thread:$0]  %s180, 16384, %s182, %s169, 512, 512, 32
        $region24: #{tpu_custom_call.1} parent=19 // pred_fallthru
          _
        // Predicated region
        $region25: #{tpu_custom_call.1} parent=19 // pred_check
          %p188 = pneg %p80
        $region26: #{tpu_custom_call.1} parent=19 // pred_check_branch
          %190 = sbr.rel (%p188) target = $region28
        $region27: #{tpu_custom_call.1} parent=19 // pred_region
          %s191 = sand.u32 %s18, 1
          %s192 = scalar_lea.sflag [#allocation6], %s191
          %s193 = sand.u32 %s70, 1
          %s194 = smul.addr %s193, 32
          %s195 = scalar_lea.vmem [#allocation5], %s194
          %s196 = smul.u32 4, %s26
          %s198 = ssub.s32 512, 512
          %199 = vsyncadd %s192, %s198
          %s200 = smul.addr %s25, 4
          %s201 = sadd.s32 %s196, %s200
          %s202 = smul.addr %s201, 128
          %s203 = scalar_lea.hbm %s1, %s202
          %s205 = sshll.u32 %s195, 4
          %s206 = int_to_ptr.vmem [resolvable:$true] %s205
          %208 = dma.hbm_to_vmem [thread:$0]  %s203, 512, %s206, %s192
        $region28: #{tpu_custom_call.1} parent=19 // pred_fallthru
          _
      $region20: #{tpu_custom_call.1} parent=5 // pred_fallthru
        _
      %p209 = scmp.le.s32.totalorder 1, %s18
      %p210 = scmp.lt.s32.totalorder %s18, 3
      %p211 = pnand %p209, %p210
      %p212 = pneg %p211
      // Predicated region
      $region29: #{tpu_custom_call.1} parent=5 // pred_check
        _
      $region30: #{tpu_custom_call.1} parent=5 // pred_check_branch
        %214 = sbr.rel (%p211) target = $region32
      $region31: #{tpu_custom_call.1} parent=5 // pred_region
        %s215 = ssub.s32 %s18, 1
        %s216 = sand.u32 %s45, 1
        %s217 = scalar_lea.sflag [#allocation3], %s216
        %s218 = sand.u32 %s45, 1
        %s219 = smul.addr %s218, 1024
        %s220 = scalar_lea.vmem [#allocation2], %s219
        // Predicated region
        $region33: #{tpu_custom_call.1} parent=31 // pred_check
          %p221 = pneg %p58
        $region34: #{tpu_custom_call.1} parent=31 // pred_check_branch
          %223 = sbr.rel (%p221) target = $region36
        $region35: #{tpu_custom_call.1} parent=31 // pred_region
          %224 = dma.done %s217, 16384
        $region36: #{tpu_custom_call.1} parent=31 // pred_fallthru
          _
        %s225 = sand.u32 %s23, 1
        %s226 = scalar_lea.sflag [#allocation6], %s225
        %s227 = sand.u32 %s73, 1
        %s228 = smul.addr %s227, 32
        %s229 = scalar_lea.vmem [#allocation5], %s228
        // Predicated region
        $region37: #{tpu_custom_call.1} parent=31 // pred_check
          %p230 = pneg %p86
        $region38: #{tpu_custom_call.1} parent=31 // pred_check_branch
          %232 = sbr.rel (%p230) target = $region40
        $region39: #{tpu_custom_call.1} parent=31 // pred_region
          %233 = dma.done %s226, 512
        $region40: #{tpu_custom_call.1} parent=31 // pred_fallthru
          _
        // Predicated region
        $region41: #{tpu_custom_call.1} parent=31 // pred_check
          %p234 = pneg %p107
        $region42: #{tpu_custom_call.1} parent=31 // pred_check_branch
          %236 = sbr.rel (%p234) target = $region44
        $region43: #{tpu_custom_call.1} parent=31 // pred_region
          %237 = dma.done [#allocation6], 256
        $region44: #{tpu_custom_call.1} parent=31 // pred_fallthru
          _
        %s238 = sand.u32 %s45, 1
        %s239 = scalar_lea.sflag [#allocation3], %s238
        %s240 = sand.u32 %s45, 1
        %s241 = smul.addr %s240, 1024
        %s242 = scalar_lea.vmem [#allocation2], %s241
        %p243 = pneg %p58
        %p244 = pneg %p55
        %s245 = sand.u32 %s23, 1
        %s246 = scalar_lea.sflag [#allocation6], %s245
        %s247 = sand.u32 %s73, 1
        %s248 = smul.addr %s247, 32
        %s249 = scalar_lea.vmem [#allocation5], %s248
        %p250 = pneg %p86
        %p251 = pneg %p83
        %p252 = pneg %p107
        %p253 = pneg %p104
        %p254 = pneg %p135
        %p255 = pneg %p132
        %s256 = sand.u32 %s122, 1
        %s257 = scalar_lea.sflag [#allocation4], %s256
        %s258 = sand.u32 %s122, 1
        %s259 = smul.addr %s258, 32
        %s260 = scalar_lea.vmem [#allocation8], %s259
        %s261 = smul.u32 4, %s28
        %s262 = smul.u32 4, %s28
        %s263 = smul.u32 4, %s28
        %v264 = vld [vmem:[#allocation7] sm:$0xff]
        %v265 = vld [vmem:[#allocation7 + $0x8] sm:$0xff]
        %v266 = vld [vmem:[%s220] sm:$0xff]
        %v267 = vld [vmem:[%s220 + $0x8] sm:$0xff]
        %v268 = vld [vmem:[%s220 + $0x10] sm:$0xff]
        %v269 = vld [vmem:[%s220 + $0x18] sm:$0xff]
        %v270 = vld [vmem:[%s220 + $0x20] sm:$0xff]
        %v271 = vld [vmem:[%s220 + $0x28] sm:$0xff]
        %v272 = vld [vmem:[%s220 + $0x30] sm:$0xff]
        %v273 = vld [vmem:[%s220 + $0x38] sm:$0xff]
        %v274 = vld [vmem:[%s220 + $0x40] sm:$0xff]
        %v275 = vld [vmem:[%s220 + $0x48] sm:$0xff]
        %v276 = vld [vmem:[%s220 + $0x50] sm:$0xff]
        %v277 = vld [vmem:[%s220 + $0x58] sm:$0xff]
        %v278 = vld [vmem:[%s220 + $0x60] sm:$0xff]
        %v279 = vld [vmem:[%s220 + $0x68] sm:$0xff]
        %v280 = vld [vmem:[%s220 + $0x70] sm:$0xff]
        %v281 = vld [vmem:[%s220 + $0x78] sm:$0xff]
        %v282 = vld [vmem:[%s220 + $0x80] sm:$0xff]
        %v283 = vld [vmem:[%s220 + $0x88] sm:$0xff]
        %v284 = vld [vmem:[%s220 + $0x90] sm:$0xff]
        %v285 = vld [vmem:[%s220 + $0x98] sm:$0xff]
        %v286 = vld [vmem:[%s220 + $0xa0] sm:$0xff]
        %v287 = vld [vmem:[%s220 + $0xa8] sm:$0xff]
        %v288 = vld [vmem:[%s220 + $0xb0] sm:$0xff]
        %v289 = vld [vmem:[%s220 + $0xb8] sm:$0xff]
        %v290 = vld [vmem:[%s220 + $0xc0] sm:$0xff]
        %v291 = vld [vmem:[%s220 + $0xc8] sm:$0xff]
        %v292 = vld [vmem:[%s220 + $0xd0] sm:$0xff]
        %v293 = vld [vmem:[%s220 + $0xd8] sm:$0xff]
        %v294 = vld [vmem:[%s220 + $0xe0] sm:$0xff]
        %v295 = vld [vmem:[%s220 + $0xe8] sm:$0xff]
        %v296 = vld [vmem:[%s220 + $0xf0] sm:$0xff]
        %v297 = vld [vmem:[%s220 + $0xf8] sm:$0xff]
        %v298 = vld [vmem:[%s220 + $0x100] sm:$0xff]
        %v299 = vld [vmem:[%s220 + $0x108] sm:$0xff]
        %v300 = vld [vmem:[%s220 + $0x110] sm:$0xff]
        %v301 = vld [vmem:[%s220 + $0x118] sm:$0xff]
        %v302 = vld [vmem:[%s220 + $0x120] sm:$0xff]
        %v303 = vld [vmem:[%s220 + $0x128] sm:$0xff]
        %v304 = vld [vmem:[%s220 + $0x130] sm:$0xff]
        %v305 = vld [vmem:[%s220 + $0x138] sm:$0xff]
        %v306 = vld [vmem:[%s220 + $0x140] sm:$0xff]
        %v307 = vld [vmem:[%s220 + $0x148] sm:$0xff]
        %v308 = vld [vmem:[%s220 + $0x150] sm:$0xff]
        %v309 = vld [vmem:[%s220 + $0x158] sm:$0xff]
        %v310 = vld [vmem:[%s220 + $0x160] sm:$0xff]
        %v311 = vld [vmem:[%s220 + $0x168] sm:$0xff]
        %v312 = vld [vmem:[%s220 + $0x170] sm:$0xff]
        %v313 = vld [vmem:[%s220 + $0x178] sm:$0xff]
        %v314 = vld [vmem:[%s220 + $0x180] sm:$0xff]
        %v315 = vld [vmem:[%s220 + $0x188] sm:$0xff]
        %v316 = vld [vmem:[%s220 + $0x190] sm:$0xff]
        %v317 = vld [vmem:[%s220 + $0x198] sm:$0xff]
        %v318 = vld [vmem:[%s220 + $0x1a0] sm:$0xff]
        %v319 = vld [vmem:[%s220 + $0x1a8] sm:$0xff]
        %v320 = vld [vmem:[%s220 + $0x1b0] sm:$0xff]
        %v321 = vld [vmem:[%s220 + $0x1b8] sm:$0xff]
        %v322 = vld [vmem:[%s220 + $0x1c0] sm:$0xff]
        %v323 = vld [vmem:[%s220 + $0x1c8] sm:$0xff]
        %v324 = vld [vmem:[%s220 + $0x1d0] sm:$0xff]
        %v325 = vld [vmem:[%s220 + $0x1d8] sm:$0xff]
        %v326 = vld [vmem:[%s220 + $0x1e0] sm:$0xff]
        %v327 = vld [vmem:[%s220 + $0x1e8] sm:$0xff]
        %v328 = vld [vmem:[%s220 + $0x1f0] sm:$0xff]
        %v329 = vld [vmem:[%s220 + $0x1f8] sm:$0xff]
        %v330 = vld [vmem:[%s220 + $0x200] sm:$0xff]
        %v331 = vld [vmem:[%s220 + $0x208] sm:$0xff]
        %v332 = vld [vmem:[%s220 + $0x210] sm:$0xff]
        %v333 = vld [vmem:[%s220 + $0x218] sm:$0xff]
        %v334 = vld [vmem:[%s220 + $0x220] sm:$0xff]
        %v335 = vld [vmem:[%s220 + $0x228] sm:$0xff]
        %v336 = vld [vmem:[%s220 + $0x230] sm:$0xff]
        %v337 = vld [vmem:[%s220 + $0x238] sm:$0xff]
        %v338 = vld [vmem:[%s220 + $0x240] sm:$0xff]
        %v339 = vld [vmem:[%s220 + $0x248] sm:$0xff]
        %v340 = vld [vmem:[%s220 + $0x250] sm:$0xff]
        %v341 = vld [vmem:[%s220 + $0x258] sm:$0xff]
        %v342 = vld [vmem:[%s220 + $0x260] sm:$0xff]
        %v343 = vld [vmem:[%s220 + $0x268] sm:$0xff]
        %v344 = vld [vmem:[%s220 + $0x270] sm:$0xff]
        %v345 = vld [vmem:[%s220 + $0x278] sm:$0xff]
        %v346 = vld [vmem:[%s220 + $0x280] sm:$0xff]
        %v347 = vld [vmem:[%s220 + $0x288] sm:$0xff]
        %v348 = vld [vmem:[%s220 + $0x290] sm:$0xff]
        %v349 = vld [vmem:[%s220 + $0x298] sm:$0xff]
        %v350 = vld [vmem:[%s220 + $0x2a0] sm:$0xff]
        %v351 = vld [vmem:[%s220 + $0x2a8] sm:$0xff]
        %v352 = vld [vmem:[%s220 + $0x2b0] sm:$0xff]
        %v353 = vld [vmem:[%s220 + $0x2b8] sm:$0xff]
        %v354 = vld [vmem:[%s220 + $0x2c0] sm:$0xff]
        %v355 = vld [vmem:[%s220 + $0x2c8] sm:$0xff]
        %v356 = vld [vmem:[%s220 + $0x2d0] sm:$0xff]
        %v357 = vld [vmem:[%s220 + $0x2d8] sm:$0xff]
        %v358 = vld [vmem:[%s220 + $0x2e0] sm:$0xff]
        %v359 = vld [vmem:[%s220 + $0x2e8] sm:$0xff]
        %v360 = vld [vmem:[%s220 + $0x2f0] sm:$0xff]
        %v361 = vld [vmem:[%s220 + $0x2f8] sm:$0xff]
        %v362 = vld [vmem:[%s220 + $0x300] sm:$0xff]
        %v363 = vld [vmem:[%s220 + $0x308] sm:$0xff]
        %v364 = vld [vmem:[%s220 + $0x310] sm:$0xff]
        %v365 = vld [vmem:[%s220 + $0x318] sm:$0xff]
        %v366 = vld [vmem:[%s220 + $0x320] sm:$0xff]
        %v367 = vld [vmem:[%s220 + $0x328] sm:$0xff]
        %v368 = vld [vmem:[%s220 + $0x330] sm:$0xff]
        %v369 = vld [vmem:[%s220 + $0x338] sm:$0xff]
        %v370 = vld [vmem:[%s220 + $0x340] sm:$0xff]
        %v371 = vld [vmem:[%s220 + $0x348] sm:$0xff]
        %v372 = vld [vmem:[%s220 + $0x350] sm:$0xff]
        %v373 = vld [vmem:[%s220 + $0x358] sm:$0xff]
        %v374 = vld [vmem:[%s220 + $0x360] sm:$0xff]
        %v375 = vld [vmem:[%s220 + $0x368] sm:$0xff]
        %v376 = vld [vmem:[%s220 + $0x370] sm:$0xff]
        %v377 = vld [vmem:[%s220 + $0x378] sm:$0xff]
        %v378 = vld [vmem:[%s220 + $0x380] sm:$0xff]
        %v379 = vld [vmem:[%s220 + $0x388] sm:$0xff]
        %v380 = vld [vmem:[%s220 + $0x390] sm:$0xff]
        %v381 = vld [vmem:[%s220 + $0x398] sm:$0xff]
        %v382 = vld [vmem:[%s220 + $0x3a0] sm:$0xff]
        %v383 = vld [vmem:[%s220 + $0x3a8] sm:$0xff]
        %v384 = vld [vmem:[%s220 + $0x3b0] sm:$0xff]
        %v385 = vld [vmem:[%s220 + $0x3b8] sm:$0xff]
        %v386 = vld [vmem:[%s220 + $0x3c0] sm:$0xff]
        %v387 = vld [vmem:[%s220 + $0x3c8] sm:$0xff]
        %v388 = vld [vmem:[%s220 + $0x3d0] sm:$0xff]
        %v389 = vld [vmem:[%s220 + $0x3d8] sm:$0xff]
        %v390 = vld [vmem:[%s220 + $0x3e0] sm:$0xff]
        %v391 = vld [vmem:[%s220 + $0x3e8] sm:$0xff]
        %v392 = vld [vmem:[%s220 + $0x3f0] sm:$0xff]
        %v393 = vld [vmem:[%s220 + $0x3f8] sm:$0xff]
        %v394 = vld [vmem:[%s229] sm:$0xff]
        %v395 = vld [vmem:[%s229 + $0x8] sm:$0xff]
        %v396 = vld [vmem:[%s229 + $0x10] sm:$0xff]
        %v397 = vld [vmem:[%s229 + $0x18] sm:$0xff]
        %398 = vmatprep.subr.mxu0 %v267
        %399 = vmatpush1.msra.mxu0 %v266
        %400 = vmatprep.subr.mxu0 %v271
        %401 = vmatpush1.msra.mxu0 %v270
        %402 = vmatprep.subr.mxu0 %v275
        %403 = vmatpush1.msra.mxu0 %v274
        %404 = vmatprep.subr.mxu0 %v279
        %405 = vmatpush1.msra.mxu0 %v278
        %406 = vmatprep.subr.mxu0 %v283
        %407 = vmatpush1.msra.mxu0 %v282
        %408 = vmatprep.subr.mxu0 %v287
        %409 = vmatpush1.msra.mxu0 %v286
        %410 = vmatprep.subr.mxu0 %v291
        %411 = vmatpush1.msra.mxu0 %v290
        %412 = vmatprep.subr.mxu0 %v295
        %413 = vmatpush1.msra.mxu0 %v294
        %414 = vmatprep.subr.mxu0 %v299
        %415 = vmatpush1.msra.mxu0 %v298
        %416 = vmatprep.subr.mxu0 %v303
        %417 = vmatpush1.msra.mxu0 %v302
        %418 = vmatprep.subr.mxu0 %v307
        %419 = vmatpush1.msra.mxu0 %v306
        %420 = vmatprep.subr.mxu0 %v311
        %421 = vmatpush1.msra.mxu0 %v310
        %422 = vmatprep.subr.mxu0 %v315
        %423 = vmatpush1.msra.mxu0 %v314
        %424 = vmatprep.subr.mxu0 %v319
        %425 = vmatpush1.msra.mxu0 %v318
        %426 = vmatprep.subr.mxu0 %v323
        %427 = vmatpush1.msra.mxu0 %v322
        %428 = vmatprep.subr.mxu0 %v327
        %429 = vmatpush1.msra.mxu0 %v326
        %430 = vmatprep.subr.mxu0 %v331
        %431 = vmatpush1.msra.mxu0 %v330
        %432 = vmatprep.subr.mxu0 %v335
        %433 = vmatpush1.msra.mxu0 %v334
        %434 = vmatprep.subr.mxu0 %v339
        %435 = vmatpush1.msra.mxu0 %v338
        %436 = vmatprep.subr.mxu0 %v343
        %437 = vmatpush1.msra.mxu0 %v342
        %438 = vmatprep.subr.mxu0 %v347
        %439 = vmatpush1.msra.mxu0 %v346
        %440 = vmatprep.subr.mxu0 %v351
        %441 = vmatpush1.msra.mxu0 %v350
        %442 = vmatprep.subr.mxu0 %v355
        %443 = vmatpush1.msra.mxu0 %v354
        %444 = vmatprep.subr.mxu0 %v359
        %445 = vmatpush1.msra.mxu0 %v358
        %446 = vmatprep.subr.mxu0 %v363
        %447 = vmatpush1.msra.mxu0 %v362
        %448 = vmatprep.subr.mxu0 %v367
        %449 = vmatpush1.msra.mxu0 %v366
        %450 = vmatprep.subr.mxu0 %v371
        %451 = vmatpush1.msra.mxu0 %v370
        %452 = vmatprep.subr.mxu0 %v375
        %453 = vmatpush1.msra.mxu0 %v374
        %454 = vmatprep.subr.mxu0 %v379
        %455 = vmatpush1.msra.mxu0 %v378
        %456 = vmatprep.subr.mxu0 %v383
        %457 = vmatpush1.msra.mxu0 %v382
        %458 = vmatprep.subr.mxu0 %v387
        %459 = vmatpush1.msra.mxu0 %v386
        %460 = vmatprep.subr.mxu0 %v391
        %461 = vmatpush1.msra.mxu0 %v390
        %462 = vmatprep.mubr.f32.mxu0 %v265
        %463 = vmatmul.mubr.f32.gmra.mrb[0].mxu0 %v264
        %v464 = vpop.f32.mrb[0].mxu0
        %v465 = vadd.f32 %v394, %v464
        %v466 = vpop.f32.mrb[0].mxu0
        %v467 = vadd.f32 %v395, %v466
        %468 = vdwg.mxu0
        %469 = vmatprep.subr.mxu0 %v269
        %470 = vmatpush1.msra.mxu0 %v268
        %471 = vmatprep.subr.mxu0 %v273
        %472 = vmatpush1.msra.mxu0 %v272
        %473 = vmatprep.subr.mxu0 %v277
        %474 = vmatpush1.msra.mxu0 %v276
        %475 = vmatprep.subr.mxu0 %v281
        %476 = vmatpush1.msra.mxu0 %v280
        %477 = vmatprep.subr.mxu0 %v285
        %478 = vmatpush1.msra.mxu0 %v284
        %479 = vmatprep.subr.mxu0 %v289
        %480 = vmatpush1.msra.mxu0 %v288
        %481 = vmatprep.subr.mxu0 %v293
        %482 = vmatpush1.msra.mxu0 %v292
        %483 = vmatprep.subr.mxu0 %v297
        %484 = vmatpush1.msra.mxu0 %v296
        %485 = vmatprep.subr.mxu0 %v301
        %486 = vmatpush1.msra.mxu0 %v300
        %487 = vmatprep.subr.mxu0 %v305
        %488 = vmatpush1.msra.mxu0 %v304
        %489 = vmatprep.subr.mxu0 %v309
        %490 = vmatpush1.msra.mxu0 %v308
        %491 = vmatprep.subr.mxu0 %v313
        %492 = vmatpush1.msra.mxu0 %v312
        %493 = vmatprep.subr.mxu0 %v317
        %494 = vmatpush1.msra.mxu0 %v316
        %495 = vmatprep.subr.mxu0 %v321
        %496 = vmatpush1.msra.mxu0 %v320
        %497 = vmatprep.subr.mxu0 %v325
        %498 = vmatpush1.msra.mxu0 %v324
        %499 = vmatprep.subr.mxu0 %v329
        %500 = vmatpush1.msra.mxu0 %v328
        %501 = vmatprep.subr.mxu0 %v333
        %502 = vmatpush1.msra.mxu0 %v332
        %503 = vmatprep.subr.mxu0 %v337
        %504 = vmatpush1.msra.mxu0 %v336
        %505 = vmatprep.subr.mxu0 %v341
        %506 = vmatpush1.msra.mxu0 %v340
        %507 = vmatprep.subr.mxu0 %v345
        %508 = vmatpush1.msra.mxu0 %v344
        %509 = vmatprep.subr.mxu0 %v349
        %510 = vmatpush1.msra.mxu0 %v348
        %511 = vmatprep.subr.mxu0 %v353
        %512 = vmatpush1.msra.mxu0 %v352
        %513 = vmatprep.subr.mxu0 %v357
        %514 = vmatpush1.msra.mxu0 %v356
        %515 = vmatprep.subr.mxu0 %v361
        %516 = vmatpush1.msra.mxu0 %v360
        %517 = vmatprep.subr.mxu0 %v365
        %518 = vmatpush1.msra.mxu0 %v364
        %519 = vmatprep.subr.mxu0 %v369
        %520 = vmatpush1.msra.mxu0 %v368
        %521 = vmatprep.subr.mxu0 %v373
        %522 = vmatpush1.msra.mxu0 %v372
        %523 = vmatprep.subr.mxu0 %v377
        %524 = vmatpush1.msra.mxu0 %v376
        %525 = vmatprep.subr.mxu0 %v381
        %526 = vmatpush1.msra.mxu0 %v380
        %527 = vmatprep.subr.mxu0 %v385
        %528 = vmatpush1.msra.mxu0 %v384
        %529 = vmatprep.subr.mxu0 %v389
        %530 = vmatpush1.msra.mxu0 %v388
        %531 = vmatprep.subr.mxu0 %v393
        %532 = vmatpush1.msra.mxu0 %v392
        %533 = vmatprep.mubr.f32.mxu0 %v265
        %534 = vmatmul.mubr.f32.gmra.mrb[0].mxu0 %v264
        %v535 = vpop.f32.mrb[0].mxu0
        %v536 = vadd.f32 %v396, %v535
        %v537 = vpop.f32.mrb[0].mxu0
        %v538 = vadd.f32 %v397, %v537
        %539 = vdwg.mxu0
        %540 = vst [vmem:[%s260] sm:$0xff] %v465
        %541 = vst [vmem:[%s260 + $0x8] sm:$0xff] %v467
        %542 = vst [vmem:[%s260 + $0x10] sm:$0xff] %v536
        %543 = vst [vmem:[%s260 + $0x18] sm:$0xff] %v538
        %s544 = sand.u32 %s122, 1
        %s545 = scalar_lea.sflag [#allocation4], %s544
        %s546 = sand.u32 %s122, 1
        %s547 = smul.addr %s546, 32
        %s548 = scalar_lea.vmem [#allocation8], %s547
        // Predicated region
        $region45: #{tpu_custom_call.1} parent=31 // pred_check
          %p549 = pneg %p132
        $region46: #{tpu_custom_call.1} parent=31 // pred_check_branch
          %551 = sbr.rel (%p549) target = $region48
        $region47: #{tpu_custom_call.1} parent=31 // pred_region
          %s552 = smul.u32 4, %s28
          %s554 = ssub.s32 512, 512
          %555 = vsyncadd %s545, %s554
          %s556 = smul.addr %s27, 4
          %s557 = sadd.s32 %s552, %s556
          %s558 = smul.addr %s557, 128
          %s559 = scalar_lea.hbm %s3, %s558
          %s561 = sshll.u32 %s548, 4
          %s562 = int_to_ptr.vmem [resolvable:$true] %s561
          %564 = dma.vmem_to_hbm [thread:$0]  %s562, 512, %s559, %s545
        $region48: #{tpu_custom_call.1} parent=31 // pred_fallthru
          _
      $region32: #{tpu_custom_call.1} parent=5 // pred_fallthru
        _
      %p565 = scmp.le.s32.totalorder 2, %s18
      // Predicated region
      $region49: #{tpu_custom_call.1} parent=5 // pred_check
        %p566 = pneg %p565
      $region50: #{tpu_custom_call.1} parent=5 // pred_check_branch
        %568 = sbr.rel (%p566) target = $region52
      $region51: #{tpu_custom_call.1} parent=5 // pred_region
        %s569 = ssub.s32 %s18, 2
        // Predicated region
        $region53: #{tpu_custom_call.1} parent=51 // pred_check
          %p570 = pneg %p138
        $region54: #{tpu_custom_call.1} parent=51 // pred_check_branch
          %572 = sbr.rel (%p570) target = $region56
        $region55: #{tpu_custom_call.1} parent=51 // pred_region
          %s573 = sand.u32 %s123, 1
          %s574 = scalar_lea.sflag [#allocation4], %s573
          %s575 = sand.u32 %s123, 1
          %s576 = smul.addr %s575, 32
          %s577 = scalar_lea.vmem [#allocation8], %s576
          %578 = dma.done %s574, 512
        $region56: #{tpu_custom_call.1} parent=51 // pred_fallthru
          _
      $region52: #{tpu_custom_call.1} parent=5 // pred_fallthru
        _
    $region6: #{tpu_custom_call.1} parent=1 // loop_footer
      %s22 = sadd.s32 1, %s18
    $region7: #{tpu_custom_call.1} parent=1 // loop_footer_branch
      %17 = sbr.rel target = $region3
    $region8: #{tpu_custom_call.1} parent=1 // loop_exit
      _
    %579 = vsyncpa [#allocation3], 1
    %s580 = scalar_lea.sflag [#allocation3], 1
    %581 = vsyncpa %s580, 1
    %582 = vsyncpa [#allocation6], 1
    %s583 = scalar_lea.sflag [#allocation6], 1
    %584 = vsyncpa %s583, 1
    %585 = vsyncpa [#allocation4], 1
    %s586 = scalar_lea.sflag [#allocation4], 1
    %587 = vsyncpa %s586, 1

</llo_original>
